<compile_context>
chip_gen: v7x
topology: tpu7x:2x2x1
jax: 0.10.0
libtpu: 0.0.40
codegen_flags: <defaults>
</compile_context>

<pallas_src>
import functools

import jax
import jax.numpy as jnp
from jax import lax
from jax.experimental import pallas as pl
from jax.experimental.pallas import tpu as pltpu


def _two_sided_quantile_loss_kernel(out_ref, y_ref, len_ref, loss_ref,
                                    acc_ref, cnt_ref, *, q_hi, q_lo, t_pad):
    """Masked two-sided pinball loss, accumulated across the batch grid.

    out_ref : [TM, 2*Tp] predictions ([:, :Tp] = upper q, [:, Tp:] = lower q)
    y_ref   : [TM, Tp]   targets
    len_ref : [TM, 1]    per-row valid length (int32, already clipped to T)
    loss_ref: [1, 1]     scalar output (written on the last grid step only)
    acc_ref : [TM, Tp]   f32 elementwise loss accumulator (VMEM scratch)
    cnt_ref : [TM, 1]    f32 mask-count accumulator (VMEM scratch)
    """
    i = pl.program_id(0)

    @pl.when(i == 0)
    def _init():
        acc_ref[...] = jnp.zeros_like(acc_ref)
        cnt_ref[...] = jnp.zeros_like(cnt_ref)

    x = out_ref[...].astype(jnp.float32)            # (TM, 2*Tp)
    y = y_ref[...].astype(jnp.float32)              # (TM, Tp)
    lens = len_ref[...]                             # (TM, 1) int32

    # Static lane slices at a 128-aligned boundary -> whole-vreg selection.
    pred_hi = x[:, :t_pad]                          # (TM, Tp)
    pred_lo = x[:, t_pad:]                          # (TM, Tp)

    # Rebuild the lengths mask in-kernel (removes one full-width HBM stream).
    col = lax.broadcasted_iota(jnp.int32, y.shape, 1)       # (TM, Tp)
    mask = (col < lens).astype(jnp.float32)                 # (TM, Tp)

    def pinball(pred, q):
        err = y - pred
        # max(q*err, (q-1)*err) == err * (q - [err < 0])
        return err * (q - (err < 0.0).astype(jnp.float32))

    # Fused two-sided masked accumulation: pure VPU work per tile, no per-tile
    # cross-lane reductions.
    acc_ref[...] += mask * (pinball(pred_hi, q_hi) + pinball(pred_lo, q_lo))
    cnt_ref[...] += lens.astype(jnp.float32)

    @pl.when(i == pl.num_programs(0) - 1)
    def _finalize():
        total = jnp.sum(acc_ref[...])
        count = jnp.sum(cnt_ref[...])
        loss_ref[...] = (total / jnp.maximum(count, 1.0)).reshape(1, 1)


def quantile_estimator_criterion(out, targets, lengths, *, coverage=0.9):
    """out: [B, 2, T] (ch0 = upper quantile, ch1 = lower quantile), native dtype
    (bf16 or f32); targets: [B, T]; lengths: [B] int32 valid steps per row.
    Returns scalar f32 loss matching the module's fit() criterion."""
    tail_alpha = (1.0 - coverage) / 2.0
    B, C, T = out.shape
    assert C == 2, "QuantileEstimator criterion expects 2 quantile channels"

    # Lane-dense last dim (multiple of 128) and sublane-aligned row tile.
    Tp = pl.cdiv(T, 128) * 128
    itemsize = jnp.dtype(out.dtype).itemsize

    # Keep the double-buffered 2-channel prediction stream around ~1 MiB per
    # buffer: safe under v5e's 16 MiB scoped VMEM while leaving headroom for
    # the f32 accumulator; v6e (128 MiB) / v7x (64 MiB) have ample margin.
    budget = 1 << 20
    tm = (budget // (2 * Tp * itemsize)) // 8 * 8
    tm = int(min(max(tm, 8), 512))
    b_round8 = pl.cdiv(B, 8) * 8
    tm = min(tm, b_round8)
    Bp = pl.cdiv(B, tm) * tm

    # Pad to aligned shapes; padded rows get length 0 -> fully masked out, and
    # padded columns sit beyond every valid length -> also masked out.
    out_p = jnp.pad(out, ((0, Bp - B), (0, 0), (0, Tp - T)))
    out_2d = out_p.reshape(Bp, 2 * Tp)              # contiguous reshape (free)
    y_p = jnp.pad(targets, ((0, Bp - B), (0, Tp - T)))
    len_p = jnp.pad(jnp.clip(lengths.astype(jnp.int32), 0, T), ((0, Bp - B),))
    len_p = len_p.reshape(Bp, 1)

    grid = (Bp // tm,)
    kernel = functools.partial(_two_sided_quantile_loss_kernel,
                               q_hi=1.0 - tail_alpha, q_lo=tail_alpha,
                               t_pad=Tp)

    loss = pl.pallas_call(
        kernel,
        out_shape=jax.ShapeDtypeStruct((1, 1), jnp.float32),
        grid_spec=pltpu.PrefetchScalarGridSpec(
            num_scalar_prefetch=0,
            grid=grid,
            in_specs=[
                pl.BlockSpec((tm, 2 * Tp), lambda i: (i, 0)),  # predictions
                pl.BlockSpec((tm, Tp), lambda i: (i, 0)),      # targets
                pl.BlockSpec((tm, 1), lambda i: (i, 0)),       # lengths
            ],
            out_specs=pl.BlockSpec((1, 1), lambda i: (0, 0)),
            scratch_shapes=[
                pltpu.VMEM((tm, Tp), jnp.float32),  # elementwise loss accum
                pltpu.VMEM((tm, 1), jnp.float32),   # mask-count accum
            ],
        ),
        compiler_params=pltpu.CompilerParams(
            dimension_semantics=("arbitrary",),     # reduction axis
        ),
    )(out_2d, y_p, len_p)
    return loss[0, 0]


def _reference_criterion(out, targets, lengths, *, coverage=0.9):
    """Pure-JAX reference (matches the PyTorch masked two-sided pinball loss)."""
    tail_alpha = (1.0 - coverage) / 2.0
    out = out.astype(jnp.float32)
    targets = targets.astype(jnp.float32)
    T = targets.shape[-1]
    mask = (jnp.arange(T)[None, :]
            < jnp.clip(lengths, 0, T)[:, None]).astype(jnp.float32)

    def pinball(pred, q):
        err = targets - pred
        l = jnp.maximum(q * err, (q - 1.0) * err)
        return jnp.sum(mask * l) / jnp.maximum(jnp.sum(mask), 1.0)

    return pinball(out[:, 0, :], 1.0 - tail_alpha) + pinball(out[:, 1, :],
                                                             tail_alpha)


if __name__ == "__main__":
    key = jax.random.PRNGKey(0)
    B, T = 2, 8  # batch of 2 sequences, horizon of 8 steps

    k1, k2, k3 = jax.random.split(key, 3)
    base = jax.random.normal(k1, (B, T), dtype=jnp.float32)
    spread = jnp.abs(jax.random.normal(k2, (B, T), dtype=jnp.float32))
    # out[:, 0] = upper quantile prediction, out[:, 1] = lower quantile prediction
    out = jnp.stack([base + spread, base - spread], axis=1).astype(jnp.bfloat16)
    targets = (base + 0.3 * jax.random.normal(k3, (B, T),
                                              dtype=jnp.float32)).astype(jnp.bfloat16)
    # lengths-style mask: first sequence fully valid, second valid for 5 steps
    lengths = jnp.array([T, 5], dtype=jnp.int32)

    loss = jax.block_until_ready(
        quantile_estimator_criterion(out, targets, lengths, coverage=0.9))
    ref = jax.block_until_ready(
        _reference_criterion(out, targets, lengths, coverage=0.9))

    assert jnp.allclose(loss, ref, rtol=1e-5, atol=1e-5), (loss, ref)
    print("KERNEL_OK")
</pallas_src>

<mosaic_0001>
module attributes {stable_mosaic.version = 11 : i64} {
  func.func @_two_sided_quantile_loss_kernel(%arg0: i32, %arg1: memref<8x256xbf16, #tpu.memory_space<vmem>>, %arg2: memref<8x128xbf16, #tpu.memory_space<vmem>>, %arg3: memref<8x1xi32, #tpu.memory_space<vmem>>, %arg4: memref<1x1xf32, #tpu.memory_space<vmem>>, %arg5: memref<8x128xf32, #tpu.memory_space<vmem>>, %arg6: memref<8x1xf32, #tpu.memory_space<vmem>>) attributes {dimension_semantics = [#tpu.dimension_semantics<arbitrary>], iteration_bounds = array<i64: 1>, scalar_prefetch = 0 : i64, scratch_operands = 2 : i64, tpu.core_type = #tpu.core_type<tc>, window_params = [{transform_indices = @transform_0, window_bounds = array<i64: 8, 256>}, {transform_indices = @transform_1, window_bounds = array<i64: 8, 128>}, {transform_indices = @transform_2, window_bounds = array<i64: 8, 1>}, {pipeline_mode = #tpu.pipeline_mode<synchronous>, transform_indices = @transform_3, window_bounds = array<i64: 1, 1>}]} {
    %c0_i32 = arith.constant 0 : i32
    %0 = arith.cmpi eq, %arg0, %c0_i32 : i32
    %1 = arith.extui %0 : i1 to i32
    %c0_i32_0 = arith.constant 0 : i32
    %2 = arith.cmpi ne, %1, %c0_i32_0 : i32
    scf.if %2 {
      %cst_19 = arith.constant 0.000000e+00 : f32
      %43 = vector.broadcast %cst_19 : f32 to vector<8x128xf32>
      %c0_20 = arith.constant 0 : index
      %c0_21 = arith.constant 0 : index
      %44 = vector.load %arg5[%c0_20, %c0_21] : memref<8x128xf32, #tpu.memory_space<vmem>>, vector<8x128xf32>
      tpu.vector_store %arg5[%c0_20, %c0_21], %43 {strides = array<i32>} : memref<8x128xf32, #tpu.memory_space<vmem>>, vector<8x128xf32>,
      %cst_22 = arith.constant 0.000000e+00 : f32
      %45 = vector.broadcast %cst_22 : f32 to vector<8x1xf32>
      %c0_23 = arith.constant 0 : index
      %c0_24 = arith.constant 0 : index
      %46 = vector.load %arg6[%c0_23, %c0_24] : memref<8x1xf32, #tpu.memory_space<vmem>>, vector<8x1xf32>
      tpu.vector_store %arg6[%c0_23, %c0_24], %45 {strides = array<i32>} : memref<8x1xf32, #tpu.memory_space<vmem>>, vector<8x1xf32>,
    } else {
    }
    %c0 = arith.constant 0 : index
    %c0_1 = arith.constant 0 : index
    %3 = vector.load %arg1[%c0, %c0_1] : memref<8x256xbf16, #tpu.memory_space<vmem>>, vector<8x256xbf16>
    %4 = arith.extf %3 : vector<8x256xbf16> to vector<8x256xf32>
    %c0_2 = arith.constant 0 : index
    %c0_3 = arith.constant 0 : index
    %5 = vector.load %arg2[%c0_2, %c0_3] : memref<8x128xbf16, #tpu.memory_space<vmem>>, vector<8x128xbf16>
    %6 = arith.extf %5 : vector<8x128xbf16> to vector<8x128xf32>
    %c0_4 = arith.constant 0 : index
    %c0_5 = arith.constant 0 : index
    %7 = vector.load %arg3[%c0_4, %c0_5] : memref<8x1xi32, #tpu.memory_space<vmem>>, vector<8x1xi32>
    %8 = vector.extract_strided_slice %4 {offsets = [0, 0], sizes = [8, 128], strides = [1, 1]} : vector<8x256xf32> to vector<8x128xf32>
    %9 = vector.extract_strided_slice %4 {offsets = [0, 128], sizes = [8, 128], strides = [1, 1]} : vector<8x256xf32> to vector<8x128xf32>
    %10 = tpu.iota {dimensions = array<i32: 1>} : vector<8x128xi32>
    %11 = vector.broadcast %7 : vector<8x1xi32> to vector<8x128xi32>
    %12 = arith.cmpi slt, %10, %11 : vector<8x128xi32>
    %13 = arith.extui %12 : vector<8x128xi1> to vector<8x128xi32>
    %14 = arith.sitofp %13 : vector<8x128xi32> to vector<8x128xf32>
    %c0_6 = arith.constant 0 : index
    %c0_7 = arith.constant 0 : index
    %15 = vector.load %arg5[%c0_6, %c0_7] : memref<8x128xf32, #tpu.memory_space<vmem>>, vector<8x128xf32>
    %16 = arith.subf %6, %8 : vector<8x128xf32>
    %cst = arith.constant 0.000000e+00 : f32
    %17 = vector.broadcast %cst : f32 to vector<8x128xf32>
    %18 = arith.cmpf olt, %16, %17 : vector<8x128xf32>
    %19 = arith.extui %18 : vector<8x128xi1> to vector<8x128xi32>
    %20 = arith.sitofp %19 : vector<8x128xi32> to vector<8x128xf32>
    %cst_8 = arith.constant 0.949999988 : f32
    %21 = vector.broadcast %cst_8 : f32 to vector<8x128xf32>
    %22 = arith.subf %21, %20 : vector<8x128xf32>
    %23 = arith.mulf %16, %22 : vector<8x128xf32>
    %24 = arith.subf %6, %9 : vector<8x128xf32>
    %cst_9 = arith.constant 0.000000e+00 : f32
    %25 = vector.broadcast %cst_9 : f32 to vector<8x128xf32>
    %26 = arith.cmpf olt, %24, %25 : vector<8x128xf32>
    %27 = arith.extui %26 : vector<8x128xi1> to vector<8x128xi32>
    %28 = arith.sitofp %27 : vector<8x128xi32> to vector<8x128xf32>
    %cst_10 = arith.constant 5.000000e-02 : f32
    %29 = vector.broadcast %cst_10 : f32 to vector<8x128xf32>
    %30 = arith.subf %29, %28 : vector<8x128xf32>
    %31 = arith.mulf %24, %30 : vector<8x128xf32>
    %32 = arith.addf %23, %31 : vector<8x128xf32>
    %33 = arith.mulf %14, %32 : vector<8x128xf32>
    %34 = arith.addf %15, %33 : vector<8x128xf32>
    %c0_11 = arith.constant 0 : index
    %c0_12 = arith.constant 0 : index
    %35 = vector.load %arg5[%c0_11, %c0_12] : memref<8x128xf32, #tpu.memory_space<vmem>>, vector<8x128xf32>
    tpu.vector_store %arg5[%c0_11, %c0_12], %34 {strides = array<i32>} : memref<8x128xf32, #tpu.memory_space<vmem>>, vector<8x128xf32>,
    %c0_13 = arith.constant 0 : index
    %c0_14 = arith.constant 0 : index
    %36 = vector.load %arg6[%c0_13, %c0_14] : memref<8x1xf32, #tpu.memory_space<vmem>>, vector<8x1xf32>
    %37 = arith.sitofp %7 : vector<8x1xi32> to vector<8x1xf32>
    %38 = arith.addf %36, %37 : vector<8x1xf32>
    %c0_15 = arith.constant 0 : index
    %c0_16 = arith.constant 0 : index
    %39 = vector.load %arg6[%c0_15, %c0_16] : memref<8x1xf32, #tpu.memory_space<vmem>>, vector<8x1xf32>
    tpu.vector_store %arg6[%c0_15, %c0_16], %38 {strides = array<i32>} : memref<8x1xf32, #tpu.memory_space<vmem>>, vector<8x1xf32>,
    %c0_i32_17 = arith.constant 0 : i32
    %40 = arith.cmpi eq, %arg0, %c0_i32_17 : i32
    %41 = arith.extui %40 : i1 to i32
    %c0_i32_18 = arith.constant 0 : i32
    %42 = arith.cmpi ne, %41, %c0_i32_18 : i32
    scf.if %42 {
      %c0_19 = arith.constant 0 : index
      %c0_20 = arith.constant 0 : index
      %43 = vector.load %arg5[%c0_19, %c0_20] : memref<8x128xf32, #tpu.memory_space<vmem>>, vector<8x128xf32>
      %44 = vector.shape_cast %43 : vector<8x128xf32> to vector<1x8x128xf32>
      %cst_21 = arith.constant dense<0.000000e+00> : vector<1xf32>
      %45 = vector.multi_reduction <add>, %44, %cst_21 [1, 2] : vector<1x8x128xf32> to vector<1xf32>
      %46 = vector.shape_cast %45 : vector<1xf32> to vector<1x1x1xf32>
      %47 = vector.extract %46[0, 0, 0] : f32 from vector<1x1x1xf32>
      %c0_22 = arith.constant 0 : index
      %c0_23 = arith.constant 0 : index
      %48 = vector.load %arg6[%c0_22, %c0_23] : memref<8x1xf32, #tpu.memory_space<vmem>>, vector<8x1xf32>
      %49 = vector.shape_cast %48 : vector<8x1xf32> to vector<1x8x1xf32>
      %cst_24 = arith.constant dense<0.000000e+00> : vector<1xf32>
      %50 = vector.multi_reduction <add>, %49, %cst_24 [1, 2] : vector<1x8x1xf32> to vector<1xf32>
      %51 = vector.shape_cast %50 : vector<1xf32> to vector<1x1x1xf32>
      %52 = vector.extract %51[0, 0, 0] : f32 from vector<1x1x1xf32>
      %cst_25 = arith.constant 1.000000e+00 : f32
      %53 = arith.maximumf %52, %cst_25 : f32
      %54 = arith.divf %47, %53 : f32
      %55 = vector.broadcast %54 : f32 to vector<1x1xf32>
      %c0_26 = arith.constant 0 : index
      %c0_27 = arith.constant 0 : index
      %56 = vector.load %arg4[%c0_26, %c0_27] : memref<1x1xf32, #tpu.memory_space<vmem>>, vector<1x1xf32>
      tpu.vector_store %arg4[%c0_26, %c0_27], %55 {strides = array<i32>} : memref<1x1xf32, #tpu.memory_space<vmem>>, vector<1x1xf32>,
    } else {
    }
    return
  }
  func.func @transform_0(%arg0: i32) -> (i32, i32) {
    %c0_i32 = arith.constant 0 : i32
    %c0_i32_0 = arith.constant 0 : i32
    return %arg0, %c0_i32 : i32, i32
  }
  func.func @transform_1(%arg0: i32) -> (i32, i32) {
    %c0_i32 = arith.constant 0 : i32
    %c0_i32_0 = arith.constant 0 : i32
    return %arg0, %c0_i32 : i32, i32
  }
  func.func @transform_2(%arg0: i32) -> (i32, i32) {
    %c0_i32 = arith.constant 0 : i32
    %c0_i32_0 = arith.constant 0 : i32
    return %arg0, %c0_i32 : i32, i32
  }
  func.func @transform_3(%arg0: i32) -> (i32, i32) {
    %c0_i32 = arith.constant 0 : i32
    %c0_i32_0 = arith.constant 0 : i32
    %c0_i32_1 = arith.constant 0 : i32
    return %c0_i32, %c0_i32_0 : i32, i32
  }
}

</mosaic_0001>

<llo_original>
// kernel: tpu_custom_call.1
$region0: #{tpu_custom_call.1}
  #allocation0 [shape = 'u32[]', space=smem, size = 0x4, offset = 0x4, fixed_abs, tag = 'smem constant byte address 0x4 - core index']
  #allocation1 [shape = 'u32[144,128]{1,0:T(1,128)}', space=vmem, size = 0x12000, scoped, tag = 'internal scratch']
  #allocation2 [shape = 'f32[8,128]{1,0:T(8,128)}', space=vmem, size = 0x1000, scoped, tag = 'scratch operand']
  #allocation3 [shape = 'f32[8,1]{1,0:T(8,128)}', space=vmem, size = 0x1000, scoped, tag = 'scratch operand']
  %s0 = inlined_call_operand.vmem [shape: bf16[8,256], index: 0, kind: input, shape index: {}]
  %s1 = inlined_call_operand.vmem [shape: bf16[8,128], index: 1, kind: input, shape index: {}]
  %s2 = inlined_call_operand.vmem [shape: s32[8,1], index: 2, kind: input, shape index: {}]
  %s3 = inlined_call_operand.hbm [shape: f32[1,1], index: 3, kind: output, shape index: {}]
  %s4 = sld [smem:[#allocation0]]
  $region30: #{tpu_custom_call.1} parent=0
    _
  %s6 = ssub.s32 1, %s4
  %s7 = scalar_select 0, %s6, %s4
  $region1: #{tpu_custom_call.1} parent=0
    #allocation4 [shape = 'u8[512]{0}', space=vmem, size = 0x400, scoped, tag = 'output window, operand 0, single buffered']
    #allocation5 [shape = 's32[1]{0}', space=sflag, size = 0x4, scoped, tag = 'scoped memory for tpu_custom_call.1']
    %8 = vsyncpa [#allocation5], 0
    // Predicated region
    $region2: #{tpu_custom_call.1} parent=1 // pred_check
      _
    $region3: #{tpu_custom_call.1} parent=1 // pred_check_branch
      %10 = sbr.rel (0) target = $region5
    $region4: #{tpu_custom_call.1} parent=1 // pred_region
      _
    $region5: #{tpu_custom_call.1} parent=1 // pred_fallthru
      _
    // Predicated region
    $region6: #{tpu_custom_call.1} parent=1 // pred_check
      _
    $region7: #{tpu_custom_call.1} parent=1 // pred_check_branch
      %12 = sbr.rel (0) target = $region9
    $region8: #{tpu_custom_call.1} parent=1 // pred_region
      _
    $region9: #{tpu_custom_call.1} parent=1 // pred_fallthru
      _
    // Predicated region
    $region10: #{tpu_custom_call.1} parent=1 // pred_check
      _
    $region11: #{tpu_custom_call.1} parent=1 // pred_check_branch
      %14 = sbr.rel (0) target = $region13
    $region12: #{tpu_custom_call.1} parent=1 // pred_region
      _
    $region13: #{tpu_custom_call.1} parent=1 // pred_fallthru
      _
    %p15 = scmp.eq.s32.totalorder 0, 0
    // Predicated region
    $region14: #{tpu_custom_call.1} parent=1 // pred_check
      %p16 = pneg %p15
    $region15: #{tpu_custom_call.1} parent=1 // pred_check_branch
      %18 = sbr.rel (%p16) target = $region17
    $region16: #{tpu_custom_call.1} parent=1 // pred_region
      %19 = vst [vmem:[#allocation2] sm:$0xff] 0.0
      %vm20 = vcmask 7168
      %21 = vst.msk [vmem:[#allocation3] sm:$0xff] %vm20, 0.0
    $region17: #{tpu_custom_call.1} parent=1 // pred_fallthru
      _
    %v22 = vld [vmem:[%s0] sm:$0xff]
    %v23 = vunpack.c.l.bf16 %v22
    %v24 = vunpack.c.h.bf16 %v22
    %v25 = vld [vmem:[%s1] sm:$0xf]
    %v26 = vunpack.c.l.bf16 %v25
    %v27 = vld [vmem:[%s2] sm:$0xff]
    %v28 = vlaneseq
    %v29 = vand.u32 %v28, 127
    %30 = vset.pattern.permute.xlu0 0
    %31 = vperm.xlu0 %30, %v27
    %v32 = vpop.permute.xlu0 %31
    %vm33 = vcmp.lt.s32.totalorder %v29, %v32
    %v34 = vsel %vm33, 1, 0
    %v35 = vcvt.s32.f32 %v34
    %v36 = vld [vmem:[#allocation2] sm:$0xff]
    %v37 = vsub.f32 %v26, %v23
    %vm38 = vcmp.lt.f32.partialorder %v37, 0.0
    %v39 = vsel %vm38, 1, 0
    %v40 = vcvt.s32.f32 %v39
    %v41 = vsub.f32 0.95, %v40
    %v42 = vmul.f32 %v37, %v41
    %v43 = vsub.f32 %v26, %v24
    %vm44 = vcmp.lt.f32.partialorder %v43, 0.0
    %v45 = vsel %vm44, 1, 0
    %v46 = vcvt.s32.f32 %v45
    %v47 = vsub.f32 0.05, %v46
    %v48 = vmul.f32 %v43, %v47
    %v49 = vadd.f32 %v42, %v48
    %v50 = vmul.f32 %v35, %v49
    %v51 = vadd.f32 %v36, %v50
    %52 = vst [vmem:[#allocation2] sm:$0xff] %v51
    %v53 = vld [vmem:[#allocation3] sm:$0xff]
    %v54 = vcvt.s32.f32 %v27
    %v55 = vadd.f32 %v53, %v54
    %vm56 = vcmask 7168
    %57 = vst.msk [vmem:[#allocation3] sm:$0xff] %vm56, %v55
    // Predicated region
    $region18: #{tpu_custom_call.1} parent=1 // pred_check
      %p58 = pneg %p15
    $region19: #{tpu_custom_call.1} parent=1 // pred_check_branch
      %60 = sbr.rel (%p58) target = $region21
    $region20: #{tpu_custom_call.1} parent=1 // pred_region
      %v61 = vld [vmem:[#allocation2] sm:$0xff]
      %62 = vadd.xlane.f32.xlu0 %v61
      %v63 = vpop.xlane.xlu0 %62
      %v64 = vrot.slane %v63, 4
      %v65 = vadd.f32 %v63, %v64
      %v66 = vrot.slane %v65, 2
      %v67 = vadd.f32 %v65, %v66
      %v68 = vrot.slane %v67, 1
      %v69 = vadd.f32 %v67, %v68
      %s70 = vtos %v69
      %v71 = vld [vmem:[#allocation3] sm:$0xff]
      %v72 = vsel %vm56, %v71, 0.0
      %73 = vadd.xlane.f32.xlu0 %v72
      %v74 = vpop.xlane.xlu0 %73
      %v75 = vrot.slane %v74, 4
      %v76 = vadd.f32 %v74, %v75
      %v77 = vrot.slane %v76, 2
      %v78 = vadd.f32 %v76, %v77
      %v79 = vrot.slane %v78, 1
      %v80 = vadd.f32 %v78, %v79
      %s81 = vtos %v80
      %s82 = smax.f32 %s81, 1.0
      %v83 = vstv %s82
      %v84 = vrcp.pop %v83
      %s85 = vtos %v84
      %s86 = smul.f32 %s70, %s85
      %v87 = vstv %s86
      %vm88 = vcmask 0
      %89 = vst.msk [vmem:[#allocation4] sm:$0x1] %vm88, %v87
    $region21: #{tpu_custom_call.1} parent=1 // pred_fallthru
      _
    // Predicated region
    $region22: #{tpu_custom_call.1} parent=1 // pred_check
      _
    $region23: #{tpu_custom_call.1} parent=1 // pred_check_branch
      %91 = sbr.rel (0) target = $region25
    $region24: #{tpu_custom_call.1} parent=1 // pred_region
      %s93 = ssub.s32 16, 16
      %94 = vsyncadd [#allocation5], %s93
      %s96 = sshll.u32 [#allocation4], 4
      %s97 = int_to_ptr.vmem [resolvable:$true] %s96
      %99 = dma.vmem_to_hbm [thread:$0]  %s97, 16, %s3, [#allocation5]
    $region25: #{tpu_custom_call.1} parent=1 // pred_fallthru
      _
    // Predicated region
    $region26: #{tpu_custom_call.1} parent=1 // pred_check
      _
    $region27: #{tpu_custom_call.1} parent=1 // pred_check_branch
      %101 = sbr.rel (0) target = $region29
    $region28: #{tpu_custom_call.1} parent=1 // pred_region
      %102 = dma.done [#allocation5], 16
    $region29: #{tpu_custom_call.1} parent=1 // pred_fallthru
      _
    %103 = vsyncpa [#allocation5], 1

</llo_original>
